<compile_context>
chip_gen: v5e
topology: v5e:2x2
jax: 0.10.0
libtpu: 0.0.40
codegen_flags: <defaults>
</compile_context>

<pallas_src>
import functools
import math

import jax
import jax.numpy as jnp
import numpy as np
from jax import lax
from jax.experimental import pallas as pl
from jax.experimental.pallas import tpu as pltpu

_LANE_W = 1024        # lane-dense slab width (each Box-Muller half is 512 = 4*128 lanes)
_MAX_TILE_ROWS = 256  # 256 x 1024 x 4B = 1 MiB per f32 block (~4 MiB with in/out double buffers)


def _round_up(n, m):
    return ((n + m - 1) // m) * m


def _gaussian_noise_kernel(seed_ref, x_ref, o_ref, *, sigma):
    tr, w = x_ref.shape
    half = w // 2

    # ---- counter-based RNG: unique global counter per Box-Muller pair --------
    row = lax.broadcasted_iota(jnp.int32, (tr, half), 0) + pl.program_id(0) * tr
    col = lax.broadcasted_iota(jnp.int32, (tr, half), 1)
    pair = row * half + col                                   # global pair index

    # Mix the seed in (int32 wrap-around arithmetic is well defined).
    key = seed_ref[0] * jnp.int32(-1640531527) + jnp.int32(-1150833019)
    c1 = (pair * 2 + key).astype(jnp.uint32)                  # two distinct counters
    c2 = c1 + jnp.uint32(1)                                   # per pair -> no reuse

    def mix(v):  # lowbias32 finalizer (strong 32-bit mixer, VPU int ops only)
        v = v ^ (v >> 16)
        v = v * jnp.uint32(0x7FEB352D)
        v = v ^ (v >> 15)
        v = v * jnp.uint32(0x846CA68B)
        v = v ^ (v >> 16)
        return v

    # Uniforms in [0, 1) with 24 random bits.
    inv24 = jnp.float32(1.0 / (1 << 24))
    u1 = (mix(c1) >> 8).astype(jnp.int32).astype(jnp.float32) * inv24
    u2 = (mix(c2) >> 8).astype(jnp.int32).astype(jnp.float32) * inv24

    # ---- Box-Muller, using BOTH outputs of every pair ------------------------
    r = jnp.sqrt(jnp.float32(-2.0) * jnp.log(jnp.float32(1.0) - u1))  # 1-u1 in (0,1]
    theta = jnp.float32(2.0 * math.pi) * u2
    z = jnp.concatenate([r * jnp.cos(theta), r * jnp.sin(theta)], axis=-1)

    # out = x + z * (sigma * x), computed in f32, stored in the native dtype.
    x = x_ref[...].astype(jnp.float32)
    o_ref[...] = (x + z * (jnp.float32(sigma) * x)).astype(o_ref.dtype)


def gaussian_noise(x, seed, *, sigma=0.1, training=True):
    """Apply multiplicative Gaussian noise: x + N(0,1) * sigma * x."""
    if (not training) or sigma == 0:
        return x

    orig_shape = x.shape
    total = x.size
    w = _LANE_W

    # Flatten to a lane-dense (rows, W) slab; zero-pad so the grid tiles evenly.
    rows = _round_up(total, w) // w
    if rows <= _MAX_TILE_ROWS:
        tile_rows = rows
    else:
        tile_rows = _MAX_TILE_ROWS
        rows = _round_up(rows, tile_rows)
    padded_total = rows * w

    x_flat = x.reshape(-1)
    if padded_total != total:
        x_flat = jnp.pad(x_flat, (0, padded_total - total))
    x2d = x_flat.reshape(rows, w)

    seed_arr = jnp.asarray([seed], dtype=jnp.int32)
    kernel = functools.partial(_gaussian_noise_kernel, sigma=float(sigma))

    out2d = pl.pallas_call(
        kernel,
        out_shape=jax.ShapeDtypeStruct((rows, w), x.dtype),
        grid_spec=pltpu.PrefetchScalarGridSpec(
            num_scalar_prefetch=1,
            grid=(rows // tile_rows,),
            in_specs=[pl.BlockSpec((tile_rows, w), lambda i, seed_ref: (i, 0))],
            out_specs=pl.BlockSpec((tile_rows, w), lambda i, seed_ref: (i, 0)),
        ),
        compiler_params=pltpu.CompilerParams(
            dimension_semantics=("parallel",)),
    )(seed_arr, x2d)

    out_flat = out2d.reshape(-1)
    if padded_total != total:
        out_flat = out_flat[:total]
    return out_flat.reshape(orig_shape)


if __name__ == "__main__":
    key = jax.random.PRNGKey(0)
    # layout: NCHW, matching the PyTorch module's conv-style inputs.
    x = jax.random.normal(key, (2, 4, 16, 16), dtype=jnp.float32)

    sigma = 0.1
    out = jax.block_until_ready(gaussian_noise(x, seed=0, sigma=sigma, training=True))

    assert out.shape == x.shape and out.dtype == x.dtype

    # Sanity check: out = x * (1 + sigma * z)  =>  implied z should look N(0,1).
    x_np = np.asarray(jax.device_get(x))
    out_np = np.asarray(jax.device_get(out))
    mask = np.abs(x_np) > 1e-2                      # avoid dividing by near-zero x
    z_implied = (out_np[mask] - x_np[mask]) / (sigma * x_np[mask])
    assert abs(float(z_implied.mean())) < 0.2, z_implied.mean()
    assert 0.7 < float(z_implied.std()) < 1.3, z_implied.std()

    # Eval mode / sigma == 0 is the identity (as in the PyTorch module).
    out_eval = jax.block_until_ready(gaussian_noise(x, seed=0, training=False))
    assert bool(jnp.array_equal(out_eval, x))

    print("KERNEL_OK")
</pallas_src>

<mosaic_0001>
module attributes {stable_mosaic.version = 11 : i64} {
  func.func @_gaussian_noise_kernel(%arg0: i32, %arg1: memref<1xi32, #tpu.memory_space<smem>>, %arg2: memref<2x1024xf32, #tpu.memory_space<vmem>>, %arg3: memref<2x1024xf32, #tpu.memory_space<vmem>>) attributes {dimension_semantics = [#tpu.dimension_semantics<parallel>], iteration_bounds = array<i64: 1>, scalar_prefetch = 1 : i64, scratch_operands = 0 : i64, tpu.core_type = #tpu.core_type<tc>, window_params = [{transform_indices = @transform_0, window_bounds = array<i64: 2, 1024>}, {transform_indices = @transform_1, window_bounds = array<i64: 2, 1024>}]} {
    %0 = tpu.iota {dimensions = array<i32: 0>} : vector<2x512xi32>
    %c2_i32 = arith.constant 2 : i32
    %1 = arith.muli %arg0, %c2_i32 : i32
    %2 = vector.broadcast %1 : i32 to vector<2x512xi32>
    %3 = arith.addi %0, %2 : vector<2x512xi32>
    %4 = tpu.iota {dimensions = array<i32: 1>} : vector<2x512xi32>
    %c512_i32 = arith.constant 512 : i32
    %5 = vector.broadcast %c512_i32 : i32 to vector<2x512xi32>
    %6 = arith.muli %3, %5 : vector<2x512xi32>
    %7 = arith.addi %6, %4 : vector<2x512xi32>
    %c0 = arith.constant 0 : index
    %8 = memref.load %arg1[%c0] : memref<1xi32, #tpu.memory_space<smem>>
    %c-1640531527_i32 = arith.constant -1640531527 : i32
    %9 = arith.muli %8, %c-1640531527_i32 : i32
    %c-1150833019_i32 = arith.constant -1150833019 : i32
    %10 = arith.addi %9, %c-1150833019_i32 : i32
    %c2_i32_0 = arith.constant 2 : i32
    %11 = vector.broadcast %c2_i32_0 : i32 to vector<2x512xi32>
    %12 = arith.muli %7, %11 : vector<2x512xi32>
    %13 = vector.broadcast %10 : i32 to vector<2x512xi32>
    %14 = arith.addi %12, %13 : vector<2x512xi32>
    %c1_i32 = arith.constant 1 : i32
    %15 = vector.broadcast %c1_i32 : i32 to vector<2x512xi32>
    %16 = arith.addi %14, %15 : vector<2x512xi32>
    %c16_i32 = arith.constant 16 : i32
    %17 = vector.broadcast %c16_i32 : i32 to vector<2x512xi32>
    %18 = arith.shrui %14, %17 : vector<2x512xi32>
    %19 = arith.xori %14, %18 : vector<2x512xi32>
    %c2146121005_i32 = arith.constant 2146121005 : i32
    %20 = vector.broadcast %c2146121005_i32 : i32 to vector<2x512xi32>
    %21 = arith.muli %19, %20 : vector<2x512xi32>
    %c15_i32 = arith.constant 15 : i32
    %22 = vector.broadcast %c15_i32 : i32 to vector<2x512xi32>
    %23 = arith.shrui %21, %22 : vector<2x512xi32>
    %24 = arith.xori %21, %23 : vector<2x512xi32>
    %c-2073254261_i32 = arith.constant -2073254261 : i32
    %25 = vector.broadcast %c-2073254261_i32 : i32 to vector<2x512xi32>
    %26 = arith.muli %24, %25 : vector<2x512xi32>
    %c16_i32_1 = arith.constant 16 : i32
    %27 = vector.broadcast %c16_i32_1 : i32 to vector<2x512xi32>
    %28 = arith.shrui %26, %27 : vector<2x512xi32>
    %29 = arith.xori %26, %28 : vector<2x512xi32>
    %c8_i32 = arith.constant 8 : i32
    %30 = vector.broadcast %c8_i32 : i32 to vector<2x512xi32>
    %31 = arith.shrui %29, %30 : vector<2x512xi32>
    %32 = arith.sitofp %31 : vector<2x512xi32> to vector<2x512xf32>
    %cst = arith.constant 5.96046448E-8 : f32
    %33 = vector.broadcast %cst : f32 to vector<2x512xf32>
    %34 = arith.mulf %32, %33 : vector<2x512xf32>
    %c16_i32_2 = arith.constant 16 : i32
    %35 = vector.broadcast %c16_i32_2 : i32 to vector<2x512xi32>
    %36 = arith.shrui %16, %35 : vector<2x512xi32>
    %37 = arith.xori %16, %36 : vector<2x512xi32>
    %c2146121005_i32_3 = arith.constant 2146121005 : i32
    %38 = vector.broadcast %c2146121005_i32_3 : i32 to vector<2x512xi32>
    %39 = arith.muli %37, %38 : vector<2x512xi32>
    %c15_i32_4 = arith.constant 15 : i32
    %40 = vector.broadcast %c15_i32_4 : i32 to vector<2x512xi32>
    %41 = arith.shrui %39, %40 : vector<2x512xi32>
    %42 = arith.xori %39, %41 : vector<2x512xi32>
    %c-2073254261_i32_5 = arith.constant -2073254261 : i32
    %43 = vector.broadcast %c-2073254261_i32_5 : i32 to vector<2x512xi32>
    %44 = arith.muli %42, %43 : vector<2x512xi32>
    %c16_i32_6 = arith.constant 16 : i32
    %45 = vector.broadcast %c16_i32_6 : i32 to vector<2x512xi32>
    %46 = arith.shrui %44, %45 : vector<2x512xi32>
    %47 = arith.xori %44, %46 : vector<2x512xi32>
    %c8_i32_7 = arith.constant 8 : i32
    %48 = vector.broadcast %c8_i32_7 : i32 to vector<2x512xi32>
    %49 = arith.shrui %47, %48 : vector<2x512xi32>
    %50 = arith.sitofp %49 : vector<2x512xi32> to vector<2x512xf32>
    %cst_8 = arith.constant 5.96046448E-8 : f32
    %51 = vector.broadcast %cst_8 : f32 to vector<2x512xf32>
    %52 = arith.mulf %50, %51 : vector<2x512xf32>
    %cst_9 = arith.constant 1.000000e+00 : f32
    %53 = vector.broadcast %cst_9 : f32 to vector<2x512xf32>
    %54 = arith.subf %53, %34 : vector<2x512xf32>
    %55 = math.log %54 : vector<2x512xf32>
    %cst_10 = arith.constant -2.000000e+00 : f32
    %56 = vector.broadcast %cst_10 : f32 to vector<2x512xf32>
    %57 = arith.mulf %56, %55 : vector<2x512xf32>
    %58 = math.sqrt %57 : vector<2x512xf32>
    %cst_11 = arith.constant 6.28318548 : f32
    %59 = vector.broadcast %cst_11 : f32 to vector<2x512xf32>
    %60 = arith.mulf %59, %52 : vector<2x512xf32>
    %61 = math.cos %60 : vector<2x512xf32>
    %62 = arith.mulf %58, %61 : vector<2x512xf32>
    %63 = math.sin %60 : vector<2x512xf32>
    %64 = arith.mulf %58, %63 : vector<2x512xf32>
    %65 = tpu.concatenate %62, %64 in 1 : vector<2x512xf32>, vector<2x512xf32> -> vector<2x1024xf32>
    %c0_12 = arith.constant 0 : index
    %c0_13 = arith.constant 0 : index
    %66 = vector.load %arg2[%c0_12, %c0_13] : memref<2x1024xf32, #tpu.memory_space<vmem>>, vector<2x1024xf32>
    %cst_14 = arith.constant 1.000000e-01 : f32
    %67 = vector.broadcast %cst_14 : f32 to vector<2x1024xf32>
    %68 = arith.mulf %67, %66 : vector<2x1024xf32>
    %69 = arith.mulf %65, %68 : vector<2x1024xf32>
    %70 = arith.addf %66, %69 : vector<2x1024xf32>
    %c0_15 = arith.constant 0 : index
    %c0_16 = arith.constant 0 : index
    %71 = vector.load %arg3[%c0_15, %c0_16] : memref<2x1024xf32, #tpu.memory_space<vmem>>, vector<2x1024xf32>
    tpu.vector_store %arg3[%c0_15, %c0_16], %70 {strides = array<i32>} : memref<2x1024xf32, #tpu.memory_space<vmem>>, vector<2x1024xf32>,
    return
  }
  func.func @transform_0(%arg0: i32, %arg1: memref<1xi32, #tpu.memory_space<smem>>) -> (i32, i32) {
    %c0_i32 = arith.constant 0 : i32
    %c0_i32_0 = arith.constant 0 : i32
    return %arg0, %c0_i32 : i32, i32
  }
  func.func @transform_1(%arg0: i32, %arg1: memref<1xi32, #tpu.memory_space<smem>>) -> (i32, i32) {
    %c0_i32 = arith.constant 0 : i32
    %c0_i32_0 = arith.constant 0 : i32
    return %arg0, %c0_i32 : i32, i32
  }
}

</mosaic_0001>

<llo_original>
// kernel: tpu_custom_call.1
$region0: #{tpu_custom_call.1}
  #allocation0 [shape = 'u32[]', space=smem, size = 0x4, offset = 0x4, fixed_abs, tag = 'smem constant byte address 0x4 - core index']
  #allocation1 [shape = 'u32[72,128]{1,0:T(1,128)}', space=vmem, size = 0x9000, scoped, tag = 'internal scratch']
  #allocation2 [shape = 's32[1]{0}', space=sflag, size = 0x4, scoped, tag = 'scoped memory for tpu_custom_call.1']
  #allocation3 [shape = 's32[1]{0:T(128)S(6)}', space=smem, size = 0x200, scoped, tag = 'prefetched SMEM operand 0']
  %s0 = inlined_call_operand.<no memory space> [shape: s32[1], index: 0, kind: input, shape index: {}]
  %s1 = inlined_call_operand.hbm [shape: f32[2,1024], index: 1, kind: input, shape index: {}]
  %s2 = inlined_call_operand.hbm [shape: f32[2,1024], index: 2, kind: output, shape index: {}]
  %s3 = sld [smem:[#allocation0]]
  $region18: #{tpu_custom_call.1} parent=0
    _
  %s5 = ssub.s32 1, %s3
  %s6 = scalar_select 0, %s5, %s3
  %7 = sst [smem:[#allocation3]] %s0
  $region1: #{tpu_custom_call.1} parent=0
    #allocation4 [shape = 'u8[8192]{0}', space=vmem, size = 0x2000, scoped, tag = 'input window, operand 1, single buffered']
    #allocation5 [shape = 's32[1]{0}', space=sflag, size = 0x4, scoped, tag = 'scoped memory for tpu_custom_call.1']
    #allocation6 [shape = 's32[1]{0}', space=sflag, size = 0x4, scoped, tag = 'scoped memory for tpu_custom_call.1']
    #allocation7 [shape = 'u8[8192]{0}', space=vmem, size = 0x2000, scoped, tag = 'output window, operand 0, single buffered']
    %8 = vsyncpa [#allocation5], 0
    %9 = vsyncpa [#allocation6], 0
    // Predicated region
    $region2: #{tpu_custom_call.1} parent=1 // pred_check
      _
    $region3: #{tpu_custom_call.1} parent=1 // pred_check_branch
      %11 = sbr.rel (0) target = $region5
    $region4: #{tpu_custom_call.1} parent=1 // pred_region
      %13 = vsyncadd [#allocation5], 0
      %s15 = sshll.u32 %s1, 4
      %s16 = int_to_ptr.hbm [resolvable:$true] %s15
      %s17 = sshll.u32 [#allocation4], 4
      %s18 = int_to_ptr.vmem [resolvable:$true] %s17
      %20 = dma.hbm_to_vmem [thread:$0]  %s16, 256, %s18, [#allocation5]
    $region5: #{tpu_custom_call.1} parent=1 // pred_fallthru
      _
    // Predicated region
    $region6: #{tpu_custom_call.1} parent=1 // pred_check
      _
    $region7: #{tpu_custom_call.1} parent=1 // pred_check_branch
      %22 = sbr.rel (0) target = $region9
    $region8: #{tpu_custom_call.1} parent=1 // pred_region
      %24 = dma.done [#allocation5], 256
    $region9: #{tpu_custom_call.1} parent=1 // pred_fallthru
      _
    %v25 = vlaneseq
    %v26 = vshrl.u32 %v25, 7
    %s27 = smul.u32 0, 2
    %v28 = vstv %s27
    %v29 = vadd.s32 %v26, %v28
    %v30 = vlaneseq
    %v31 = vand.u32 %v30, 127
    %v32 = vadd.s32 %v31, 128
    %v33 = vadd.s32 %v31, 256
    %v34 = vadd.s32 %v31, 384
    %v35 = vmul.u32 %v29, 512
    %v36 = vadd.s32 %v35, %v31
    %v37 = vadd.s32 %v35, %v32
    %v38 = vadd.s32 %v35, %v33
    %v39 = vadd.s32 %v35, %v34
    %s40 = sld [smem:[#allocation3]]
    %s41 = smul.u32 %s40, 2654435769
    %s42 = sadd.s32 %s41, 3144134277
    %v43 = vmul.u32 %v36, 2
    %v44 = vmul.u32 %v37, 2
    %v45 = vmul.u32 %v38, 2
    %v46 = vmul.u32 %v39, 2
    %v47 = vstv %s42
    %v48 = vadd.s32 %v43, %v47
    %v49 = vadd.s32 %v44, %v47
    %v50 = vadd.s32 %v45, %v47
    %v51 = vadd.s32 %v46, %v47
    %v52 = vadd.s32 %v48, 1
    %v53 = vadd.s32 %v49, 1
    %v54 = vadd.s32 %v50, 1
    %v55 = vadd.s32 %v51, 1
    %v56 = vshrl.u32 %v48, 16
    %v57 = vshrl.u32 %v49, 16
    %v58 = vshrl.u32 %v50, 16
    %v59 = vshrl.u32 %v51, 16
    %v60 = vxor.u32 %v48, %v56
    %v61 = vxor.u32 %v49, %v57
    %v62 = vxor.u32 %v50, %v58
    %v63 = vxor.u32 %v51, %v59
    %v64 = vmul.u32 %v60, 2146121005
    %v65 = vmul.u32 %v61, 2146121005
    %v66 = vmul.u32 %v62, 2146121005
    %v67 = vmul.u32 %v63, 2146121005
    %v68 = vshrl.u32 %v64, 15
    %v69 = vshrl.u32 %v65, 15
    %v70 = vshrl.u32 %v66, 15
    %v71 = vshrl.u32 %v67, 15
    %v72 = vxor.u32 %v64, %v68
    %v73 = vxor.u32 %v65, %v69
    %v74 = vxor.u32 %v66, %v70
    %v75 = vxor.u32 %v67, %v71
    %v76 = vmul.u32 %v72, 2221713035
    %v77 = vmul.u32 %v73, 2221713035
    %v78 = vmul.u32 %v74, 2221713035
    %v79 = vmul.u32 %v75, 2221713035
    %v80 = vshrl.u32 %v76, 16
    %v81 = vshrl.u32 %v77, 16
    %v82 = vshrl.u32 %v78, 16
    %v83 = vshrl.u32 %v79, 16
    %v84 = vxor.u32 %v76, %v80
    %v85 = vxor.u32 %v77, %v81
    %v86 = vxor.u32 %v78, %v82
    %v87 = vxor.u32 %v79, %v83
    %v88 = vshrl.u32 %v84, 8
    %v89 = vshrl.u32 %v85, 8
    %v90 = vshrl.u32 %v86, 8
    %v91 = vshrl.u32 %v87, 8
    %v92 = vcvt.s32.f32 %v88
    %v93 = vcvt.s32.f32 %v89
    %v94 = vcvt.s32.f32 %v90
    %v95 = vcvt.s32.f32 %v91
    %v96 = vmul.f32 %v92, 5.9604645e-08
    %v97 = vmul.f32 %v93, 5.9604645e-08
    %v98 = vmul.f32 %v94, 5.9604645e-08
    %v99 = vmul.f32 %v95, 5.9604645e-08
    %v100 = vshrl.u32 %v52, 16
    %v101 = vshrl.u32 %v53, 16
    %v102 = vshrl.u32 %v54, 16
    %v103 = vshrl.u32 %v55, 16
    %v104 = vxor.u32 %v52, %v100
    %v105 = vxor.u32 %v53, %v101
    %v106 = vxor.u32 %v54, %v102
    %v107 = vxor.u32 %v55, %v103
    %v108 = vmul.u32 %v104, 2146121005
    %v109 = vmul.u32 %v105, 2146121005
    %v110 = vmul.u32 %v106, 2146121005
    %v111 = vmul.u32 %v107, 2146121005
    %v112 = vshrl.u32 %v108, 15
    %v113 = vshrl.u32 %v109, 15
    %v114 = vshrl.u32 %v110, 15
    %v115 = vshrl.u32 %v111, 15
    %v116 = vxor.u32 %v108, %v112
    %v117 = vxor.u32 %v109, %v113
    %v118 = vxor.u32 %v110, %v114
    %v119 = vxor.u32 %v111, %v115
    %v120 = vmul.u32 %v116, 2221713035
    %v121 = vmul.u32 %v117, 2221713035
    %v122 = vmul.u32 %v118, 2221713035
    %v123 = vmul.u32 %v119, 2221713035
    %v124 = vshrl.u32 %v120, 16
    %v125 = vshrl.u32 %v121, 16
    %v126 = vshrl.u32 %v122, 16
    %v127 = vshrl.u32 %v123, 16
    %v128 = vxor.u32 %v120, %v124
    %v129 = vxor.u32 %v121, %v125
    %v130 = vxor.u32 %v122, %v126
    %v131 = vxor.u32 %v123, %v127
    %v132 = vshrl.u32 %v128, 8
    %v133 = vshrl.u32 %v129, 8
    %v134 = vshrl.u32 %v130, 8
    %v135 = vshrl.u32 %v131, 8
    %v136 = vcvt.s32.f32 %v132
    %v137 = vcvt.s32.f32 %v133
    %v138 = vcvt.s32.f32 %v134
    %v139 = vcvt.s32.f32 %v135
    %v140 = vmul.f32 %v136, 5.9604645e-08
    %v141 = vmul.f32 %v137, 5.9604645e-08
    %v142 = vmul.f32 %v138, 5.9604645e-08
    %v143 = vmul.f32 %v139, 5.9604645e-08
    %v144 = vsub.f32 1.0, %v96
    %v145 = vsub.f32 1.0, %v97
    %v146 = vsub.f32 1.0, %v98
    %v147 = vsub.f32 1.0, %v99
    %v148 = vlog2.pop %v144
    %v149 = vmul.f32 %v148, 0.6931472
    %v150 = vlog2.pop %v145
    %v151 = vmul.f32 %v150, 0.6931472
    %v152 = vlog2.pop %v146
    %v153 = vmul.f32 %v152, 0.6931472
    %v154 = vlog2.pop %v147
    %v155 = vmul.f32 %v154, 0.6931472
    %v156 = vmul.f32 %v149, -2.0
    %v157 = vmul.f32 %v151, -2.0
    %v158 = vmul.f32 %v153, -2.0
    %v159 = vmul.f32 %v155, -2.0
    %v160 = vrsqrt.pop %v156
    %v161 = vmul.f32 %v160, %v156
    %v162 = vmul.f32 %v161, %v160
    %v163 = vmul.f32 0.5, %v162
    %v164 = vsub.f32 1.5, %v163
    %v165 = vmul.f32 %v160, %v164
    %v166 = vmul.f32 %v156, %v165
    %vm167 = vcmp.eq.f32.partialorder %v156, inf
    %v168 = vsel %vm167, %v156, %v166
    %vm169 = vcmp.eq.f32.partialorder %v156, 0.0
    %v170 = vand.u32 %v156, 2147483648
    %v171 = vsel %vm169, %v170, %v168
    %v172 = vrsqrt.pop %v157
    %v173 = vmul.f32 %v172, %v157
    %v174 = vmul.f32 %v173, %v172
    %v175 = vmul.f32 0.5, %v174
    %v176 = vsub.f32 1.5, %v175
    %v177 = vmul.f32 %v172, %v176
    %v178 = vmul.f32 %v157, %v177
    %vm179 = vcmp.eq.f32.partialorder %v157, inf
    %v180 = vsel %vm179, %v157, %v178
    %vm181 = vcmp.eq.f32.partialorder %v157, 0.0
    %v182 = vand.u32 %v157, 2147483648
    %v183 = vsel %vm181, %v182, %v180
    %v184 = vrsqrt.pop %v158
    %v185 = vmul.f32 %v184, %v158
    %v186 = vmul.f32 %v185, %v184
    %v187 = vmul.f32 0.5, %v186
    %v188 = vsub.f32 1.5, %v187
    %v189 = vmul.f32 %v184, %v188
    %v190 = vmul.f32 %v158, %v189
    %vm191 = vcmp.eq.f32.partialorder %v158, inf
    %v192 = vsel %vm191, %v158, %v190
    %vm193 = vcmp.eq.f32.partialorder %v158, 0.0
    %v194 = vand.u32 %v158, 2147483648
    %v195 = vsel %vm193, %v194, %v192
    %v196 = vrsqrt.pop %v159
    %v197 = vmul.f32 %v196, %v159
    %v198 = vmul.f32 %v197, %v196
    %v199 = vmul.f32 0.5, %v198
    %v200 = vsub.f32 1.5, %v199
    %v201 = vmul.f32 %v196, %v200
    %v202 = vmul.f32 %v159, %v201
    %vm203 = vcmp.eq.f32.partialorder %v159, inf
    %v204 = vsel %vm203, %v159, %v202
    %vm205 = vcmp.eq.f32.partialorder %v159, 0.0
    %v206 = vand.u32 %v159, 2147483648
    %v207 = vsel %vm205, %v206, %v204
    %v208 = vmul.f32 %v140, 6.2831855
    %v209 = vmul.f32 %v141, 6.2831855
    %v210 = vmul.f32 %v142, 6.2831855
    %v211 = vmul.f32 %v143, 6.2831855
    %v212 = vand.u32 2147483647, %v208
    %vm213 = vcmp.le.f32.partialorder %v212, 0.7853982
    %vm214 = vcmp.lt.s32.totalorder %v208, 0
    %v215 = vand.u32 %v208, 2139095040
    %v216 = vshrl.u32 %v215, 23
    %v217 = vsub.s32 %v216, 127
    %v218 = vand.u32 2147483647, %v208
    %v219 = vand.u32 %v218, 8388607
    %v220 = vor.u32 %v219, 8388608
    %v221 = vsub.s32 0, %v220
    %v222 = vadd.s32 %v217, 1
    %vm223 = vcmp.gt.s32.totalorder %v222, 0
    %v224 = vsel %vm223, %v222, 0
    %v225 = vshrl.u32 %v224, 5
    %v226 = vand.u32 %v224, 31
    %v227 = vsub.s32 32, %v226
    %v228 = vshrl.u32 683565275, %v227
    %v229 = vshll.u32 683565275, %v226
    %v230 = vshrl.u32 2475754826, %v227
    %v231 = vor.u32 %v229, %v230
    %v232 = vshll.u32 2475754826, %v226
    %v233 = vshrl.u32 2131351028, %v227
    %v234 = vor.u32 %v232, %v233
    %v235 = vshll.u32 2131351028, %v226
    %v236 = vshrl.u32 2102212464, %v227
    %v237 = vor.u32 %v235, %v236
    %v238 = vshll.u32 2102212464, %v226
    %v239 = vshrl.u32 920167782, %v227
    %v240 = vor.u32 %v238, %v239
    %v241 = vshll.u32 920167782, %v226
    %v242 = vshrl.u32 1326507024, %v227
    %v243 = vor.u32 %v241, %v242
    %vm244 = vcmp.lt.s32.totalorder %v225, 1
    %vm245 = vcmp.lt.s32.totalorder %v225, 2
    %vm246 = vcmp.lt.s32.totalorder %v225, 3
    %vm247 = vcmp.lt.s32.totalorder %v225, 4
    %v248 = vsel %vm244, %v228, %v231
    %v249 = vsel %vm247, %v237, 2102212464
    %v250 = vsel %vm246, %v234, %v249
    %v251 = vsel %vm245, %v248, %v250
    %v252 = vsel %vm244, %v231, %v234
    %v253 = vsel %vm247, %v240, 920167782
    %v254 = vsel %vm246, %v237, %v253
    %v255 = vsel %vm245, %v252, %v254
    %v256 = vsel %vm244, %v234, %v237
    %v257 = vsel %vm247, %v243, 1326507024
    %v258 = vsel %vm246, %v240, %v257
    %v259 = vsel %vm245, %v256, %v258
    %v260 = vshll.u32 %v220, 8
    %v261 = vand.u32 %v260, 65535
    %v262 = vshrl.u32 %v260, 16
    %v263 = vand.u32 %v259, 65535
    %v264 = vshrl.u32 %v259, 16
    %v265 = vmul.u32 %v261, %v263
    %v266 = vmul.u32 %v261, %v264
    %v267 = vmul.u32 %v262, %v263
    %v268 = vmul.u32 %v262, %v264
    %v269 = vshll.u32 %v266, 16
    %v270 = vshrl.u32 %v266, 16
    %v271 = vshll.u32 %v267, 16
    %v272 = vshrl.u32 %v267, 16
    %vm273 = vc.u32 %v265, %v269
    %v274 = vsel %vm273, 1, 0
    %v275 = vadd.s32 %v265, %v269
    %v276 = vadd.s32 %v268, %v274
    %vm277 = vc.u32 %v275, %v271
    %v278 = vsel %vm277, 1, 0
    %v279 = vadd.s32 %v275, %v271
    %v280 = vadd.s32 %v276, %v278
    %v281 = vadd.s32 %v280, %v270
    %v282 = vadd.s32 %v281, %v272
    %v283 = vand.u32 %v260, 65535
    %v284 = vshrl.u32 %v260, 16
    %v285 = vand.u32 %v255, 65535
    %v286 = vshrl.u32 %v255, 16
    %v287 = vmul.u32 %v283, %v285
    %v288 = vmul.u32 %v283, %v286
    %v289 = vmul.u32 %v284, %v285
    %v290 = vmul.u32 %v284, %v286
    %v291 = vshll.u32 %v288, 16
    %v292 = vshrl.u32 %v288, 16
    %v293 = vshll.u32 %v289, 16
    %v294 = vshrl.u32 %v289, 16
    %vm295 = vc.u32 %v287, %v291
    %v296 = vsel %vm295, 1, 0
    %v297 = vadd.s32 %v287, %v291
    %v298 = vadd.s32 %v290, %v296
    %vm299 = vc.u32 %v297, %v293
    %v300 = vsel %vm299, 1, 0
    %v301 = vadd.s32 %v297, %v293
    %v302 = vadd.s32 %v298, %v300
    %v303 = vadd.s32 %v302, %v292
    %v304 = vadd.s32 %v303, %v294
    %v305 = vmul.u32 %v260, %v251
    %v306 = vadd.s32 %v282, %v301
    %vm307 = vc.u32 %v282, %v301
    %v308 = vadd.s32 %v304, 1
    %v309 = vsel %vm307, %v308, %v304
    %v310 = vadd.s32 %v305, %v309
    %v311 = vadd.s32 %v310, 536870912
    %v312 = vshrl.u32 %v311, 30
    %v313 = vshll.u32 %v312, 30
    %v314 = vsub.s32 %v310, %v313
    %vm315 = vcmp.lt.s32.totalorder %v314, 0
    %v316 = vsub.s32 0, %v314
    %v317 = vsel %vm315, %v316, %v314
    %v318 = vclz %v317
    %v319 = vsub.s32 %v318, 2
    %vm320 = vcmp.gt.s32.totalorder 0, %v319
    %v321 = vsel %vm320, 0, %v319
    %v322 = vsub.s32 32, %v321
    %v323 = vshll.u32 %v314, %v321
    %v324 = vshrl.u32 %v306, %v322
    %v325 = vor.u32 %v323, %v324
    %v326 = vsub.s32 4294967266, %v321
    %v327 = vadd.s32 %v326, 127
    %v328 = vshll.u32 %v327, 23
    %v329 = vor.u32 4788187, %v328
    %v330 = vand.u32 2147483647, %v329
    %v332 = vcvt.s32.f32 %v325
    %v333 = vmul.f32 %v332, %v330
    %v334 = vxor.u32 %v333, 2147483648
    %v335 = vsel %vm214, %v334, %v333
    %v336 = vsub.s32 4, %v312
    %v337 = vsel %vm214, %v336, %v312
    %v338 = vsel %vm213, %v208, %v335
    %v339 = vsel %vm213, 0, %v337
    %v340 = vmul.f32 %v338, %v338
    %v341 = vmul.f32 %v340, -0.001358992
    %v342 = vadd.f32 %v341, 0.041655596
    %v343 = vmul.f32 %v340, %v342
    %v344 = vadd.f32 %v343, -0.4999988
    %v345 = vmul.f32 %v340, %v344
    %v346 = vadd.f32 1.0, %v345
    %v347 = vmul.f32 %v338, %v338
    %v348 = vmul.f32 %v347, -0.00019511016
    %v349 = vadd.f32 %v348, 0.008332121
    %v350 = vmul.f32 %v347, %v349
    %v351 = vadd.f32 %v350, -0.16666654
    %v352 = vmul.f32 %v347, %v351
    %v353 = vadd.f32 %v352, 1.0
    %v354 = vmul.f32 %v353, %v338
    %vm355 = vweird.f32 %v208
    %v356 = vand.u32 %v339, 3
    %vm357 = vcmp.lt.s32.totalorder %v356, 2
    %vm358 = vcmp.eq.s32.totalorder %v356, 0
    %v359 = vxor.u32 %v354, 2147483648
    %v360 = vsel %vm358, %v346, %v359
    %vm361 = vcmp.eq.s32.totalorder %v356, 2
    %v362 = vxor.u32 %v346, 2147483648
    %v363 = vsel %vm361, %v362, %v354
    %v364 = vsel %vm357, %v360, %v363
    %v365 = vsel %vm355, nan, %v364
    %v366 = vand.u32 2147483647, %v209
    %vm367 = vcmp.le.f32.partialorder %v366, 0.7853982
    %vm368 = vcmp.lt.s32.totalorder %v209, 0
    %v369 = vand.u32 %v209, 2139095040
    %v370 = vshrl.u32 %v369, 23
    %v371 = vsub.s32 %v370, 127
    %v372 = vand.u32 2147483647, %v209
    %v373 = vand.u32 %v372, 8388607
    %v374 = vor.u32 %v373, 8388608
    %v375 = vsub.s32 0, %v374
    %v376 = vadd.s32 %v371, 1
    %vm377 = vcmp.gt.s32.totalorder %v376, 0
    %v378 = vsel %vm377, %v376, 0
    %v379 = vshrl.u32 %v378, 5
    %v380 = vand.u32 %v378, 31
    %v381 = vsub.s32 32, %v380
    %v382 = vshrl.u32 683565275, %v381
    %v383 = vshll.u32 683565275, %v380
    %v384 = vshrl.u32 2475754826, %v381
    %v385 = vor.u32 %v383, %v384
    %v386 = vshll.u32 2475754826, %v380
    %v387 = vshrl.u32 2131351028, %v381
    %v388 = vor.u32 %v386, %v387
    %v389 = vshll.u32 2131351028, %v380
    %v390 = vshrl.u32 2102212464, %v381
    %v391 = vor.u32 %v389, %v390
    %v392 = vshll.u32 2102212464, %v380
    %v393 = vshrl.u32 920167782, %v381
    %v394 = vor.u32 %v392, %v393
    %v395 = vshll.u32 920167782, %v380
    %v396 = vshrl.u32 1326507024, %v381
    %v397 = vor.u32 %v395, %v396
    %vm398 = vcmp.lt.s32.totalorder %v379, 1
    %vm399 = vcmp.lt.s32.totalorder %v379, 2
    %vm400 = vcmp.lt.s32.totalorder %v379, 3
    %vm401 = vcmp.lt.s32.totalorder %v379, 4
    %v402 = vsel %vm398, %v382, %v385
    %v403 = vsel %vm401, %v391, 2102212464
    %v404 = vsel %vm400, %v388, %v403
    %v405 = vsel %vm399, %v402, %v404
    %v406 = vsel %vm398, %v385, %v388
    %v407 = vsel %vm401, %v394, 920167782
    %v408 = vsel %vm400, %v391, %v407
    %v409 = vsel %vm399, %v406, %v408
    %v410 = vsel %vm398, %v388, %v391
    %v411 = vsel %vm401, %v397, 1326507024
    %v412 = vsel %vm400, %v394, %v411
    %v413 = vsel %vm399, %v410, %v412
    %v414 = vshll.u32 %v374, 8
    %v415 = vand.u32 %v414, 65535
    %v416 = vshrl.u32 %v414, 16
    %v417 = vand.u32 %v413, 65535
    %v418 = vshrl.u32 %v413, 16
    %v419 = vmul.u32 %v415, %v417
    %v420 = vmul.u32 %v415, %v418
    %v421 = vmul.u32 %v416, %v417
    %v422 = vmul.u32 %v416, %v418
    %v423 = vshll.u32 %v420, 16
    %v424 = vshrl.u32 %v420, 16
    %v425 = vshll.u32 %v421, 16
    %v426 = vshrl.u32 %v421, 16
    %vm427 = vc.u32 %v419, %v423
    %v428 = vsel %vm427, 1, 0
    %v429 = vadd.s32 %v419, %v423
    %v430 = vadd.s32 %v422, %v428
    %vm431 = vc.u32 %v429, %v425
    %v432 = vsel %vm431, 1, 0
    %v433 = vadd.s32 %v429, %v425
    %v434 = vadd.s32 %v430, %v432
    %v435 = vadd.s32 %v434, %v424
    %v436 = vadd.s32 %v435, %v426
    %v437 = vand.u32 %v414, 65535
    %v438 = vshrl.u32 %v414, 16
    %v439 = vand.u32 %v409, 65535
    %v440 = vshrl.u32 %v409, 16
    %v441 = vmul.u32 %v437, %v439
    %v442 = vmul.u32 %v437, %v440
    %v443 = vmul.u32 %v438, %v439
    %v444 = vmul.u32 %v438, %v440
    %v445 = vshll.u32 %v442, 16
    %v446 = vshrl.u32 %v442, 16
    %v447 = vshll.u32 %v443, 16
    %v448 = vshrl.u32 %v443, 16
    %vm449 = vc.u32 %v441, %v445
    %v450 = vsel %vm449, 1, 0
    %v451 = vadd.s32 %v441, %v445
    %v452 = vadd.s32 %v444, %v450
    %vm453 = vc.u32 %v451, %v447
    %v454 = vsel %vm453, 1, 0
    %v455 = vadd.s32 %v451, %v447
    %v456 = vadd.s32 %v452, %v454
    %v457 = vadd.s32 %v456, %v446
    %v458 = vadd.s32 %v457, %v448
    %v459 = vmul.u32 %v414, %v405
    %v460 = vadd.s32 %v436, %v455
    %vm461 = vc.u32 %v436, %v455
    %v462 = vadd.s32 %v458, 1
    %v463 = vsel %vm461, %v462, %v458
    %v464 = vadd.s32 %v459, %v463
    %v465 = vadd.s32 %v464, 536870912
    %v466 = vshrl.u32 %v465, 30
    %v467 = vshll.u32 %v466, 30
    %v468 = vsub.s32 %v464, %v467
    %vm469 = vcmp.lt.s32.totalorder %v468, 0
    %v470 = vsub.s32 0, %v468
    %v471 = vsel %vm469, %v470, %v468
    %v472 = vclz %v471
    %v473 = vsub.s32 %v472, 2
    %vm474 = vcmp.gt.s32.totalorder 0, %v473
    %v475 = vsel %vm474, 0, %v473
    %v476 = vsub.s32 32, %v475
    %v477 = vshll.u32 %v468, %v475
    %v478 = vshrl.u32 %v460, %v476
    %v479 = vor.u32 %v477, %v478
    %v480 = vsub.s32 4294967266, %v475
    %v481 = vadd.s32 %v480, 127
    %v482 = vshll.u32 %v481, 23
    %v483 = vor.u32 4788187, %v482
    %v484 = vand.u32 2147483647, %v483
    %v486 = vcvt.s32.f32 %v479
    %v487 = vmul.f32 %v486, %v484
    %v488 = vxor.u32 %v487, 2147483648
    %v489 = vsel %vm368, %v488, %v487
    %v490 = vsub.s32 4, %v466
    %v491 = vsel %vm368, %v490, %v466
    %v492 = vsel %vm367, %v209, %v489
    %v493 = vsel %vm367, 0, %v491
    %v494 = vmul.f32 %v492, %v492
    %v495 = vmul.f32 %v494, -0.001358992
    %v496 = vadd.f32 %v495, 0.041655596
    %v497 = vmul.f32 %v494, %v496
    %v498 = vadd.f32 %v497, -0.4999988
    %v499 = vmul.f32 %v494, %v498
    %v500 = vadd.f32 1.0, %v499
    %v501 = vmul.f32 %v492, %v492
    %v502 = vmul.f32 %v501, -0.00019511016
    %v503 = vadd.f32 %v502, 0.008332121
    %v504 = vmul.f32 %v501, %v503
    %v505 = vadd.f32 %v504, -0.16666654
    %v506 = vmul.f32 %v501, %v505
    %v507 = vadd.f32 %v506, 1.0
    %v508 = vmul.f32 %v507, %v492
    %vm509 = vweird.f32 %v209
    %v510 = vand.u32 %v493, 3
    %vm511 = vcmp.lt.s32.totalorder %v510, 2
    %vm512 = vcmp.eq.s32.totalorder %v510, 0
    %v513 = vxor.u32 %v508, 2147483648
    %v514 = vsel %vm512, %v500, %v513
    %vm515 = vcmp.eq.s32.totalorder %v510, 2
    %v516 = vxor.u32 %v500, 2147483648
    %v517 = vsel %vm515, %v516, %v508
    %v518 = vsel %vm511, %v514, %v517
    %v519 = vsel %vm509, nan, %v518
    %v520 = vand.u32 2147483647, %v210
    %vm521 = vcmp.le.f32.partialorder %v520, 0.7853982
    %vm522 = vcmp.lt.s32.totalorder %v210, 0
    %v523 = vand.u32 %v210, 2139095040
    %v524 = vshrl.u32 %v523, 23
    %v525 = vsub.s32 %v524, 127
    %v526 = vand.u32 2147483647, %v210
    %v527 = vand.u32 %v526, 8388607
    %v528 = vor.u32 %v527, 8388608
    %v529 = vsub.s32 0, %v528
    %v530 = vadd.s32 %v525, 1
    %vm531 = vcmp.gt.s32.totalorder %v530, 0
    %v532 = vsel %vm531, %v530, 0
    %v533 = vshrl.u32 %v532, 5
    %v534 = vand.u32 %v532, 31
    %v535 = vsub.s32 32, %v534
    %v536 = vshrl.u32 683565275, %v535
    %v537 = vshll.u32 683565275, %v534
    %v538 = vshrl.u32 2475754826, %v535
    %v539 = vor.u32 %v537, %v538
    %v540 = vshll.u32 2475754826, %v534
    %v541 = vshrl.u32 2131351028, %v535
    %v542 = vor.u32 %v540, %v541
    %v543 = vshll.u32 2131351028, %v534
    %v544 = vshrl.u32 2102212464, %v535
    %v545 = vor.u32 %v543, %v544
    %v546 = vshll.u32 2102212464, %v534
    %v547 = vshrl.u32 920167782, %v535
    %v548 = vor.u32 %v546, %v547
    %v549 = vshll.u32 920167782, %v534
    %v550 = vshrl.u32 1326507024, %v535
    %v551 = vor.u32 %v549, %v550
    %vm552 = vcmp.lt.s32.totalorder %v533, 1
    %vm553 = vcmp.lt.s32.totalorder %v533, 2
    %vm554 = vcmp.lt.s32.totalorder %v533, 3
    %vm555 = vcmp.lt.s32.totalorder %v533, 4
    %v556 = vsel %vm552, %v536, %v539
    %v557 = vsel %vm555, %v545, 2102212464
    %v558 = vsel %vm554, %v542, %v557
    %v559 = vsel %vm553, %v556, %v558
    %v560 = vsel %vm552, %v539, %v542
    %v561 = vsel %vm555, %v548, 920167782
    %v562 = vsel %vm554, %v545, %v561
    %v563 = vsel %vm553, %v560, %v562
    %v564 = vsel %vm552, %v542, %v545
    %v565 = vsel %vm555, %v551, 1326507024
    %v566 = vsel %vm554, %v548, %v565
    %v567 = vsel %vm553, %v564, %v566
    %v568 = vshll.u32 %v528, 8
    %v569 = vand.u32 %v568, 65535
    %v570 = vshrl.u32 %v568, 16
    %v571 = vand.u32 %v567, 65535
    %v572 = vshrl.u32 %v567, 16
    %v573 = vmul.u32 %v569, %v571
    %v574 = vmul.u32 %v569, %v572
    %v575 = vmul.u32 %v570, %v571
    %v576 = vmul.u32 %v570, %v572
    %v577 = vshll.u32 %v574, 16
    %v578 = vshrl.u32 %v574, 16
    %v579 = vshll.u32 %v575, 16
    %v580 = vshrl.u32 %v575, 16
    %vm581 = vc.u32 %v573, %v577
    %v582 = vsel %vm581, 1, 0
    %v583 = vadd.s32 %v573, %v577
    %v584 = vadd.s32 %v576, %v582
    %vm585 = vc.u32 %v583, %v579
    %v586 = vsel %vm585, 1, 0
    %v587 = vadd.s32 %v583, %v579
    %v588 = vadd.s32 %v584, %v586
    %v589 = vadd.s32 %v588, %v578
    %v590 = vadd.s32 %v589, %v580
    %v591 = vand.u32 %v568, 65535
    %v592 = vshrl.u32 %v568, 16
    %v593 = vand.u32 %v563, 65535
    %v594 = vshrl.u32 %v563, 16
    %v595 = vmul.u32 %v591, %v593
    %v596 = vmul.u32 %v591, %v594
    %v597 = vmul.u32 %v592, %v593
    %v598 = vmul.u32 %v592, %v594
    %v599 = vshll.u32 %v596, 16
    %v600 = vshrl.u32 %v596, 16
    %v601 = vshll.u32 %v597, 16
    %v602 = vshrl.u32 %v597, 16
    %vm603 = vc.u32 %v595, %v599
    %v604 = vsel %vm603, 1, 0
    %v605 = vadd.s32 %v595, %v599
    %v606 = vadd.s32 %v598, %v604
    %vm607 = vc.u32 %v605, %v601
    %v608 = vsel %vm607, 1, 0
    %v609 = vadd.s32 %v605, %v601
    %v610 = vadd.s32 %v606, %v608
    %v611 = vadd.s32 %v610, %v600
    %v612 = vadd.s32 %v611, %v602
    %v613 = vmul.u32 %v568, %v559
    %v614 = vadd.s32 %v590, %v609
    %vm615 = vc.u32 %v590, %v609
    %v616 = vadd.s32 %v612, 1
    %v617 = vsel %vm615, %v616, %v612
    %v618 = vadd.s32 %v613, %v617
    %v619 = vadd.s32 %v618, 536870912
    %v620 = vshrl.u32 %v619, 30
    %v621 = vshll.u32 %v620, 30
    %v622 = vsub.s32 %v618, %v621
    %vm623 = vcmp.lt.s32.totalorder %v622, 0
    %v624 = vsub.s32 0, %v622
    %v625 = vsel %vm623, %v624, %v622
    %v626 = vclz %v625
    %v627 = vsub.s32 %v626, 2
    %vm628 = vcmp.gt.s32.totalorder 0, %v627
    %v629 = vsel %vm628, 0, %v627
    %v630 = vsub.s32 32, %v629
    %v631 = vshll.u32 %v622, %v629
    %v632 = vshrl.u32 %v614, %v630
    %v633 = vor.u32 %v631, %v632
    %v634 = vsub.s32 4294967266, %v629
    %v635 = vadd.s32 %v634, 127
    %v636 = vshll.u32 %v635, 23
    %v637 = vor.u32 4788187, %v636
    %v638 = vand.u32 2147483647, %v637
    %v640 = vcvt.s32.f32 %v633
    %v641 = vmul.f32 %v640, %v638
    %v642 = vxor.u32 %v641, 2147483648
    %v643 = vsel %vm522, %v642, %v641
    %v644 = vsub.s32 4, %v620
    %v645 = vsel %vm522, %v644, %v620
    %v646 = vsel %vm521, %v210, %v643
    %v647 = vsel %vm521, 0, %v645
    %v648 = vmul.f32 %v646, %v646
    %v649 = vmul.f32 %v648, -0.001358992
    %v650 = vadd.f32 %v649, 0.041655596
    %v651 = vmul.f32 %v648, %v650
    %v652 = vadd.f32 %v651, -0.4999988
    %v653 = vmul.f32 %v648, %v652
    %v654 = vadd.f32 1.0, %v653
    %v655 = vmul.f32 %v646, %v646
    %v656 = vmul.f32 %v655, -0.00019511016
    %v657 = vadd.f32 %v656, 0.008332121
    %v658 = vmul.f32 %v655, %v657
    %v659 = vadd.f32 %v658, -0.16666654
    %v660 = vmul.f32 %v655, %v659
    %v661 = vadd.f32 %v660, 1.0
    %v662 = vmul.f32 %v661, %v646
    %vm663 = vweird.f32 %v210
    %v664 = vand.u32 %v647, 3
    %vm665 = vcmp.lt.s32.totalorder %v664, 2
    %vm666 = vcmp.eq.s32.totalorder %v664, 0
    %v667 = vxor.u32 %v662, 2147483648
    %v668 = vsel %vm666, %v654, %v667
    %vm669 = vcmp.eq.s32.totalorder %v664, 2
    %v670 = vxor.u32 %v654, 2147483648
    %v671 = vsel %vm669, %v670, %v662
    %v672 = vsel %vm665, %v668, %v671
    %v673 = vsel %vm663, nan, %v672
    %v674 = vand.u32 2147483647, %v211
    %vm675 = vcmp.le.f32.partialorder %v674, 0.7853982
    %vm676 = vcmp.lt.s32.totalorder %v211, 0
    %v677 = vand.u32 %v211, 2139095040
    %v678 = vshrl.u32 %v677, 23
    %v679 = vsub.s32 %v678, 127
    %v680 = vand.u32 2147483647, %v211
    %v681 = vand.u32 %v680, 8388607
    %v682 = vor.u32 %v681, 8388608
    %v683 = vsub.s32 0, %v682
    %v684 = vadd.s32 %v679, 1
    %vm685 = vcmp.gt.s32.totalorder %v684, 0
    %v686 = vsel %vm685, %v684, 0
    %v687 = vshrl.u32 %v686, 5
    %v688 = vand.u32 %v686, 31
    %v689 = vsub.s32 32, %v688
    %v690 = vshrl.u32 683565275, %v689
    %v691 = vshll.u32 683565275, %v688
    %v692 = vshrl.u32 2475754826, %v689
    %v693 = vor.u32 %v691, %v692
    %v694 = vshll.u32 2475754826, %v688
    %v695 = vshrl.u32 2131351028, %v689
    %v696 = vor.u32 %v694, %v695
    %v697 = vshll.u32 2131351028, %v688
    %v698 = vshrl.u32 2102212464, %v689
    %v699 = vor.u32 %v697, %v698
    %v700 = vshll.u32 2102212464, %v688
    %v701 = vshrl.u32 920167782, %v689
    %v702 = vor.u32 %v700, %v701
    %v703 = vshll.u32 920167782, %v688
    %v704 = vshrl.u32 1326507024, %v689
    %v705 = vor.u32 %v703, %v704
    %vm706 = vcmp.lt.s32.totalorder %v687, 1
    %vm707 = vcmp.lt.s32.totalorder %v687, 2
    %vm708 = vcmp.lt.s32.totalorder %v687, 3
    %vm709 = vcmp.lt.s32.totalorder %v687, 4
    %v710 = vsel %vm706, %v690, %v693
    %v711 = vsel %vm709, %v699, 2102212464
    %v712 = vsel %vm708, %v696, %v711
    %v713 = vsel %vm707, %v710, %v712
    %v714 = vsel %vm706, %v693, %v696
    %v715 = vsel %vm709, %v702, 920167782
    %v716 = vsel %vm708, %v699, %v715
    %v717 = vsel %vm707, %v714, %v716
    %v718 = vsel %vm706, %v696, %v699
    %v719 = vsel %vm709, %v705, 1326507024
    %v720 = vsel %vm708, %v702, %v719
    %v721 = vsel %vm707, %v718, %v720
    %v722 = vshll.u32 %v682, 8
    %v723 = vand.u32 %v722, 65535
    %v724 = vshrl.u32 %v722, 16
    %v725 = vand.u32 %v721, 65535
    %v726 = vshrl.u32 %v721, 16
    %v727 = vmul.u32 %v723, %v725
    %v728 = vmul.u32 %v723, %v726
    %v729 = vmul.u32 %v724, %v725
    %v730 = vmul.u32 %v724, %v726
    %v731 = vshll.u32 %v728, 16
    %v732 = vshrl.u32 %v728, 16
    %v733 = vshll.u32 %v729, 16
    %v734 = vshrl.u32 %v729, 16
    %vm735 = vc.u32 %v727, %v731
    %v736 = vsel %vm735, 1, 0
    %v737 = vadd.s32 %v727, %v731
    %v738 = vadd.s32 %v730, %v736
    %vm739 = vc.u32 %v737, %v733
    %v740 = vsel %vm739, 1, 0
    %v741 = vadd.s32 %v737, %v733
    %v742 = vadd.s32 %v738, %v740
    %v743 = vadd.s32 %v742, %v732
    %v744 = vadd.s32 %v743, %v734
    %v745 = vand.u32 %v722, 65535
    %v746 = vshrl.u32 %v722, 16
    %v747 = vand.u32 %v717, 65535
    %v748 = vshrl.u32 %v717, 16
    %v749 = vmul.u32 %v745, %v747
    %v750 = vmul.u32 %v745, %v748
    %v751 = vmul.u32 %v746, %v747
    %v752 = vmul.u32 %v746, %v748
    %v753 = vshll.u32 %v750, 16
    %v754 = vshrl.u32 %v750, 16
    %v755 = vshll.u32 %v751, 16
    %v756 = vshrl.u32 %v751, 16
    %vm757 = vc.u32 %v749, %v753
    %v758 = vsel %vm757, 1, 0
    %v759 = vadd.s32 %v749, %v753
    %v760 = vadd.s32 %v752, %v758
    %vm761 = vc.u32 %v759, %v755
    %v762 = vsel %vm761, 1, 0
    %v763 = vadd.s32 %v759, %v755
    %v764 = vadd.s32 %v760, %v762
    %v765 = vadd.s32 %v764, %v754
    %v766 = vadd.s32 %v765, %v756
    %v767 = vmul.u32 %v722, %v713
    %v768 = vadd.s32 %v744, %v763
    %vm769 = vc.u32 %v744, %v763
    %v770 = vadd.s32 %v766, 1
    %v771 = vsel %vm769, %v770, %v766
    %v772 = vadd.s32 %v767, %v771
    %v773 = vadd.s32 %v772, 536870912
    %v774 = vshrl.u32 %v773, 30
    %v775 = vshll.u32 %v774, 30
    %v776 = vsub.s32 %v772, %v775
    %vm777 = vcmp.lt.s32.totalorder %v776, 0
    %v778 = vsub.s32 0, %v776
    %v779 = vsel %vm777, %v778, %v776
    %v780 = vclz %v779
    %v781 = vsub.s32 %v780, 2
    %vm782 = vcmp.gt.s32.totalorder 0, %v781
    %v783 = vsel %vm782, 0, %v781
    %v784 = vsub.s32 32, %v783
    %v785 = vshll.u32 %v776, %v783
    %v786 = vshrl.u32 %v768, %v784
    %v787 = vor.u32 %v785, %v786
    %v788 = vsub.s32 4294967266, %v783
    %v789 = vadd.s32 %v788, 127
    %v790 = vshll.u32 %v789, 23
    %v791 = vor.u32 4788187, %v790
    %v792 = vand.u32 2147483647, %v791
    %v794 = vcvt.s32.f32 %v787
    %v795 = vmul.f32 %v794, %v792
    %v796 = vxor.u32 %v795, 2147483648
    %v797 = vsel %vm676, %v796, %v795
    %v798 = vsub.s32 4, %v774
    %v799 = vsel %vm676, %v798, %v774
    %v800 = vsel %vm675, %v211, %v797
    %v801 = vsel %vm675, 0, %v799
    %v802 = vmul.f32 %v800, %v800
    %v803 = vmul.f32 %v802, -0.001358992
    %v804 = vadd.f32 %v803, 0.041655596
    %v805 = vmul.f32 %v802, %v804
    %v806 = vadd.f32 %v805, -0.4999988
    %v807 = vmul.f32 %v802, %v806
    %v808 = vadd.f32 1.0, %v807
    %v809 = vmul.f32 %v800, %v800
    %v810 = vmul.f32 %v809, -0.00019511016
    %v811 = vadd.f32 %v810, 0.008332121
    %v812 = vmul.f32 %v809, %v811
    %v813 = vadd.f32 %v812, -0.16666654
    %v814 = vmul.f32 %v809, %v813
    %v815 = vadd.f32 %v814, 1.0
    %v816 = vmul.f32 %v815, %v800
    %vm817 = vweird.f32 %v211
    %v818 = vand.u32 %v801, 3
    %vm819 = vcmp.lt.s32.totalorder %v818, 2
    %vm820 = vcmp.eq.s32.totalorder %v818, 0
    %v821 = vxor.u32 %v816, 2147483648
    %v822 = vsel %vm820, %v808, %v821
    %vm823 = vcmp.eq.s32.totalorder %v818, 2
    %v824 = vxor.u32 %v808, 2147483648
    %v825 = vsel %vm823, %v824, %v816
    %v826 = vsel %vm819, %v822, %v825
    %v827 = vsel %vm817, nan, %v826
    %v828 = vmul.f32 %v171, %v365
    %v829 = vmul.f32 %v183, %v519
    %v830 = vmul.f32 %v195, %v673
    %v831 = vmul.f32 %v207, %v827
    %v832 = vand.u32 2147483647, %v208
    %vm833 = vcmp.le.f32.partialorder %v832, 0.7853982
    %vm834 = vcmp.lt.s32.totalorder %v208, 0
    %v835 = vand.u32 %v208, 2139095040
    %v836 = vshrl.u32 %v835, 23
    %v837 = vsub.s32 %v836, 127
    %v838 = vand.u32 2147483647, %v208
    %v839 = vand.u32 %v838, 8388607
    %v840 = vor.u32 %v839, 8388608
    %v841 = vsub.s32 0, %v840
    %v842 = vadd.s32 %v837, 1
    %vm843 = vcmp.gt.s32.totalorder %v842, 0
    %v844 = vsel %vm843, %v842, 0
    %v845 = vshrl.u32 %v844, 5
    %v846 = vand.u32 %v844, 31
    %v847 = vsub.s32 32, %v846
    %v848 = vshrl.u32 683565275, %v847
    %v849 = vshll.u32 683565275, %v846
    %v850 = vshrl.u32 2475754826, %v847
    %v851 = vor.u32 %v849, %v850
    %v852 = vshll.u32 2475754826, %v846
    %v853 = vshrl.u32 2131351028, %v847
    %v854 = vor.u32 %v852, %v853
    %v855 = vshll.u32 2131351028, %v846
    %v856 = vshrl.u32 2102212464, %v847
    %v857 = vor.u32 %v855, %v856
    %v858 = vshll.u32 2102212464, %v846
    %v859 = vshrl.u32 920167782, %v847
    %v860 = vor.u32 %v858, %v859
    %v861 = vshll.u32 920167782, %v846
    %v862 = vshrl.u32 1326507024, %v847
    %v863 = vor.u32 %v861, %v862
    %vm864 = vcmp.lt.s32.totalorder %v845, 1
    %vm865 = vcmp.lt.s32.totalorder %v845, 2
    %vm866 = vcmp.lt.s32.totalorder %v845, 3
    %vm867 = vcmp.lt.s32.totalorder %v845, 4
    %v868 = vsel %vm864, %v848, %v851
    %v869 = vsel %vm867, %v857, 2102212464
    %v870 = vsel %vm866, %v854, %v869
    %v871 = vsel %vm865, %v868, %v870
    %v872 = vsel %vm864, %v851, %v854
    %v873 = vsel %vm867, %v860, 920167782
    %v874 = vsel %vm866, %v857, %v873
    %v875 = vsel %vm865, %v872, %v874
    %v876 = vsel %vm864, %v854, %v857
    %v877 = vsel %vm867, %v863, 1326507024
    %v878 = vsel %vm866, %v860, %v877
    %v879 = vsel %vm865, %v876, %v878
    %v880 = vshll.u32 %v840, 8
    %v881 = vand.u32 %v880, 65535
    %v882 = vshrl.u32 %v880, 16
    %v883 = vand.u32 %v879, 65535
    %v884 = vshrl.u32 %v879, 16
    %v885 = vmul.u32 %v881, %v883
    %v886 = vmul.u32 %v881, %v884
    %v887 = vmul.u32 %v882, %v883
    %v888 = vmul.u32 %v882, %v884
    %v889 = vshll.u32 %v886, 16
    %v890 = vshrl.u32 %v886, 16
    %v891 = vshll.u32 %v887, 16
    %v892 = vshrl.u32 %v887, 16
    %vm893 = vc.u32 %v885, %v889
    %v894 = vsel %vm893, 1, 0
    %v895 = vadd.s32 %v885, %v889
    %v896 = vadd.s32 %v888, %v894
    %vm897 = vc.u32 %v895, %v891
    %v898 = vsel %vm897, 1, 0
    %v899 = vadd.s32 %v895, %v891
    %v900 = vadd.s32 %v896, %v898
    %v901 = vadd.s32 %v900, %v890
    %v902 = vadd.s32 %v901, %v892
    %v903 = vand.u32 %v880, 65535
    %v904 = vshrl.u32 %v880, 16
    %v905 = vand.u32 %v875, 65535
    %v906 = vshrl.u32 %v875, 16
    %v907 = vmul.u32 %v903, %v905
    %v908 = vmul.u32 %v903, %v906
    %v909 = vmul.u32 %v904, %v905
    %v910 = vmul.u32 %v904, %v906
    %v911 = vshll.u32 %v908, 16
    %v912 = vshrl.u32 %v908, 16
    %v913 = vshll.u32 %v909, 16
    %v914 = vshrl.u32 %v909, 16
    %vm915 = vc.u32 %v907, %v911
    %v916 = vsel %vm915, 1, 0
    %v917 = vadd.s32 %v907, %v911
    %v918 = vadd.s32 %v910, %v916
    %vm919 = vc.u32 %v917, %v913
    %v920 = vsel %vm919, 1, 0
    %v921 = vadd.s32 %v917, %v913
    %v922 = vadd.s32 %v918, %v920
    %v923 = vadd.s32 %v922, %v912
    %v924 = vadd.s32 %v923, %v914
    %v925 = vmul.u32 %v880, %v871
    %v926 = vadd.s32 %v902, %v921
    %vm927 = vc.u32 %v902, %v921
    %v928 = vadd.s32 %v924, 1
    %v929 = vsel %vm927, %v928, %v924
    %v930 = vadd.s32 %v925, %v929
    %v931 = vadd.s32 %v930, 536870912
    %v932 = vshrl.u32 %v931, 30
    %v933 = vshll.u32 %v932, 30
    %v934 = vsub.s32 %v930, %v933
    %vm935 = vcmp.lt.s32.totalorder %v934, 0
    %v936 = vsub.s32 0, %v934
    %v937 = vsel %vm935, %v936, %v934
    %v938 = vclz %v937
    %v939 = vsub.s32 %v938, 2
    %vm940 = vcmp.gt.s32.totalorder 0, %v939
    %v941 = vsel %vm940, 0, %v939
    %v942 = vsub.s32 32, %v941
    %v943 = vshll.u32 %v934, %v941
    %v944 = vshrl.u32 %v926, %v942
    %v945 = vor.u32 %v943, %v944
    %v946 = vsub.s32 4294967266, %v941
    %v947 = vadd.s32 %v946, 127
    %v948 = vshll.u32 %v947, 23
    %v949 = vor.u32 4788187, %v948
    %v950 = vand.u32 2147483647, %v949
    %v952 = vcvt.s32.f32 %v945
    %v953 = vmul.f32 %v952, %v950
    %v954 = vxor.u32 %v953, 2147483648
    %v955 = vsel %vm834, %v954, %v953
    %v956 = vsub.s32 4, %v932
    %v957 = vsel %vm834, %v956, %v932
    %v958 = vsel %vm833, %v208, %v955
    %v959 = vsel %vm833, 0, %v957
    %v960 = vmul.f32 %v958, %v958
    %v961 = vmul.f32 %v960, -0.001358992
    %v962 = vadd.f32 %v961, 0.041655596
    %v963 = vmul.f32 %v960, %v962
    %v964 = vadd.f32 %v963, -0.4999988
    %v965 = vmul.f32 %v960, %v964
    %v966 = vadd.f32 1.0, %v965
    %v967 = vmul.f32 %v958, %v958
    %v968 = vmul.f32 %v967, -0.00019511016
    %v969 = vadd.f32 %v968, 0.008332121
    %v970 = vmul.f32 %v967, %v969
    %v971 = vadd.f32 %v970, -0.16666654
    %v972 = vmul.f32 %v967, %v971
    %v973 = vadd.f32 %v972, 1.0
    %v974 = vmul.f32 %v973, %v958
    %vm975 = vweird.f32 %v208
    %v976 = vadd.s32 %v959, 3
    %v977 = vand.u32 %v976, 3
    %vm978 = vcmp.lt.s32.totalorder %v977, 2
    %vm979 = vcmp.eq.s32.totalorder %v977, 0
    %v980 = vxor.u32 %v974, 2147483648
    %v981 = vsel %vm979, %v966, %v980
    %vm982 = vcmp.eq.s32.totalorder %v977, 2
    %v983 = vxor.u32 %v966, 2147483648
    %v984 = vsel %vm982, %v983, %v974
    %v985 = vsel %vm978, %v981, %v984
    %v986 = vsel %vm975, nan, %v985
    %v987 = vand.u32 2147483647, %v209
    %vm988 = vcmp.le.f32.partialorder %v987, 0.7853982
    %vm989 = vcmp.lt.s32.totalorder %v209, 0
    %v990 = vand.u32 %v209, 2139095040
    %v991 = vshrl.u32 %v990, 23
    %v992 = vsub.s32 %v991, 127
    %v993 = vand.u32 2147483647, %v209
    %v994 = vand.u32 %v993, 8388607
    %v995 = vor.u32 %v994, 8388608
    %v996 = vsub.s32 0, %v995
    %v997 = vadd.s32 %v992, 1
    %vm998 = vcmp.gt.s32.totalorder %v997, 0
    %v999 = vsel %vm998, %v997, 0
    %v1000 = vshrl.u32 %v999, 5
    %v1001 = vand.u32 %v999, 31
    %v1002 = vsub.s32 32, %v1001
    %v1003 = vshrl.u32 683565275, %v1002
    %v1004 = vshll.u32 683565275, %v1001
    %v1005 = vshrl.u32 2475754826, %v1002
    %v1006 = vor.u32 %v1004, %v1005
    %v1007 = vshll.u32 2475754826, %v1001
    %v1008 = vshrl.u32 2131351028, %v1002
    %v1009 = vor.u32 %v1007, %v1008
    %v1010 = vshll.u32 2131351028, %v1001
    %v1011 = vshrl.u32 2102212464, %v1002
    %v1012 = vor.u32 %v1010, %v1011
    %v1013 = vshll.u32 2102212464, %v1001
    %v1014 = vshrl.u32 920167782, %v1002
    %v1015 = vor.u32 %v1013, %v1014
    %v1016 = vshll.u32 920167782, %v1001
    %v1017 = vshrl.u32 1326507024, %v1002
    %v1018 = vor.u32 %v1016, %v1017
    %vm1019 = vcmp.lt.s32.totalorder %v1000, 1
    %vm1020 = vcmp.lt.s32.totalorder %v1000, 2
    %vm1021 = vcmp.lt.s32.totalorder %v1000, 3
    %vm1022 = vcmp.lt.s32.totalorder %v1000, 4
    %v1023 = vsel %vm1019, %v1003, %v1006
    %v1024 = vsel %vm1022, %v1012, 2102212464
    %v1025 = vsel %vm1021, %v1009, %v1024
    %v1026 = vsel %vm1020, %v1023, %v1025
    %v1027 = vsel %vm1019, %v1006, %v1009
    %v1028 = vsel %vm1022, %v1015, 920167782
    %v1029 = vsel %vm1021, %v1012, %v1028
    %v1030 = vsel %vm1020, %v1027, %v1029
    %v1031 = vsel %vm1019, %v1009, %v1012
    %v1032 = vsel %vm1022, %v1018, 1326507024
    %v1033 = vsel %vm1021, %v1015, %v1032
    %v1034 = vsel %vm1020, %v1031, %v1033
    %v1035 = vshll.u32 %v995, 8
    %v1036 = vand.u32 %v1035, 65535
    %v1037 = vshrl.u32 %v1035, 16
    %v1038 = vand.u32 %v1034, 65535
    %v1039 = vshrl.u32 %v1034, 16
    %v1040 = vmul.u32 %v1036, %v1038
    %v1041 = vmul.u32 %v1036, %v1039
    %v1042 = vmul.u32 %v1037, %v1038
    %v1043 = vmul.u32 %v1037, %v1039
    %v1044 = vshll.u32 %v1041, 16
    %v1045 = vshrl.u32 %v1041, 16
    %v1046 = vshll.u32 %v1042, 16
    %v1047 = vshrl.u32 %v1042, 16
    %vm1048 = vc.u32 %v1040, %v1044
    %v1049 = vsel %vm1048, 1, 0
    %v1050 = vadd.s32 %v1040, %v1044
    %v1051 = vadd.s32 %v1043, %v1049
    %vm1052 = vc.u32 %v1050, %v1046
    %v1053 = vsel %vm1052, 1, 0
    %v1054 = vadd.s32 %v1050, %v1046
    %v1055 = vadd.s32 %v1051, %v1053
    %v1056 = vadd.s32 %v1055, %v1045
    %v1057 = vadd.s32 %v1056, %v1047
    %v1058 = vand.u32 %v1035, 65535
    %v1059 = vshrl.u32 %v1035, 16
    %v1060 = vand.u32 %v1030, 65535
    %v1061 = vshrl.u32 %v1030, 16
    %v1062 = vmul.u32 %v1058, %v1060
    %v1063 = vmul.u32 %v1058, %v1061
    %v1064 = vmul.u32 %v1059, %v1060
    %v1065 = vmul.u32 %v1059, %v1061
    %v1066 = vshll.u32 %v1063, 16
    %v1067 = vshrl.u32 %v1063, 16
    %v1068 = vshll.u32 %v1064, 16
    %v1069 = vshrl.u32 %v1064, 16
    %vm1070 = vc.u32 %v1062, %v1066
    %v1071 = vsel %vm1070, 1, 0
    %v1072 = vadd.s32 %v1062, %v1066
    %v1073 = vadd.s32 %v1065, %v1071
    %vm1074 = vc.u32 %v1072, %v1068
    %v1075 = vsel %vm1074, 1, 0
    %v1076 = vadd.s32 %v1072, %v1068
    %v1077 = vadd.s32 %v1073, %v1075
    %v1078 = vadd.s32 %v1077, %v1067
    %v1079 = vadd.s32 %v1078, %v1069
    %v1080 = vmul.u32 %v1035, %v1026
    %v1081 = vadd.s32 %v1057, %v1076
    %vm1082 = vc.u32 %v1057, %v1076
    %v1083 = vadd.s32 %v1079, 1
    %v1084 = vsel %vm1082, %v1083, %v1079
    %v1085 = vadd.s32 %v1080, %v1084
    %v1086 = vadd.s32 %v1085, 536870912
    %v1087 = vshrl.u32 %v1086, 30
    %v1088 = vshll.u32 %v1087, 30
    %v1089 = vsub.s32 %v1085, %v1088
    %vm1090 = vcmp.lt.s32.totalorder %v1089, 0
    %v1091 = vsub.s32 0, %v1089
    %v1092 = vsel %vm1090, %v1091, %v1089
    %v1093 = vclz %v1092
    %v1094 = vsub.s32 %v1093, 2
    %vm1095 = vcmp.gt.s32.totalorder 0, %v1094
    %v1096 = vsel %vm1095, 0, %v1094
    %v1097 = vsub.s32 32, %v1096
    %v1098 = vshll.u32 %v1089, %v1096
    %v1099 = vshrl.u32 %v1081, %v1097
    %v1100 = vor.u32 %v1098, %v1099
    %v1101 = vsub.s32 4294967266, %v1096
    %v1102 = vadd.s32 %v1101, 127
    %v1103 = vshll.u32 %v1102, 23
    %v1104 = vor.u32 4788187, %v1103
    %v1105 = vand.u32 2147483647, %v1104
    %v1107 = vcvt.s32.f32 %v1100
    %v1108 = vmul.f32 %v1107, %v1105
    %v1109 = vxor.u32 %v1108, 2147483648
    %v1110 = vsel %vm989, %v1109, %v1108
    %v1111 = vsub.s32 4, %v1087
    %v1112 = vsel %vm989, %v1111, %v1087
    %v1113 = vsel %vm988, %v209, %v1110
    %v1114 = vsel %vm988, 0, %v1112
    %v1115 = vmul.f32 %v1113, %v1113
    %v1116 = vmul.f32 %v1115, -0.001358992
    %v1117 = vadd.f32 %v1116, 0.041655596
    %v1118 = vmul.f32 %v1115, %v1117
    %v1119 = vadd.f32 %v1118, -0.4999988
    %v1120 = vmul.f32 %v1115, %v1119
    %v1121 = vadd.f32 1.0, %v1120
    %v1122 = vmul.f32 %v1113, %v1113
    %v1123 = vmul.f32 %v1122, -0.00019511016
    %v1124 = vadd.f32 %v1123, 0.008332121
    %v1125 = vmul.f32 %v1122, %v1124
    %v1126 = vadd.f32 %v1125, -0.16666654
    %v1127 = vmul.f32 %v1122, %v1126
    %v1128 = vadd.f32 %v1127, 1.0
    %v1129 = vmul.f32 %v1128, %v1113
    %vm1130 = vweird.f32 %v209
    %v1131 = vadd.s32 %v1114, 3
    %v1132 = vand.u32 %v1131, 3
    %vm1133 = vcmp.lt.s32.totalorder %v1132, 2
    %vm1134 = vcmp.eq.s32.totalorder %v1132, 0
    %v1135 = vxor.u32 %v1129, 2147483648
    %v1136 = vsel %vm1134, %v1121, %v1135
    %vm1137 = vcmp.eq.s32.totalorder %v1132, 2
    %v1138 = vxor.u32 %v1121, 2147483648
    %v1139 = vsel %vm1137, %v1138, %v1129
    %v1140 = vsel %vm1133, %v1136, %v1139
    %v1141 = vsel %vm1130, nan, %v1140
    %v1142 = vand.u32 2147483647, %v210
    %vm1143 = vcmp.le.f32.partialorder %v1142, 0.7853982
    %vm1144 = vcmp.lt.s32.totalorder %v210, 0
    %v1145 = vand.u32 %v210, 2139095040
    %v1146 = vshrl.u32 %v1145, 23
    %v1147 = vsub.s32 %v1146, 127
    %v1148 = vand.u32 2147483647, %v210
    %v1149 = vand.u32 %v1148, 8388607
    %v1150 = vor.u32 %v1149, 8388608
    %v1151 = vsub.s32 0, %v1150
    %v1152 = vadd.s32 %v1147, 1
    %vm1153 = vcmp.gt.s32.totalorder %v1152, 0
    %v1154 = vsel %vm1153, %v1152, 0
    %v1155 = vshrl.u32 %v1154, 5
    %v1156 = vand.u32 %v1154, 31
    %v1157 = vsub.s32 32, %v1156
    %v1158 = vshrl.u32 683565275, %v1157
    %v1159 = vshll.u32 683565275, %v1156
    %v1160 = vshrl.u32 2475754826, %v1157
    %v1161 = vor.u32 %v1159, %v1160
    %v1162 = vshll.u32 2475754826, %v1156
    %v1163 = vshrl.u32 2131351028, %v1157
    %v1164 = vor.u32 %v1162, %v1163
    %v1165 = vshll.u32 2131351028, %v1156
    %v1166 = vshrl.u32 2102212464, %v1157
    %v1167 = vor.u32 %v1165, %v1166
    %v1168 = vshll.u32 2102212464, %v1156
    %v1169 = vshrl.u32 920167782, %v1157
    %v1170 = vor.u32 %v1168, %v1169
    %v1171 = vshll.u32 920167782, %v1156
    %v1172 = vshrl.u32 1326507024, %v1157
    %v1173 = vor.u32 %v1171, %v1172
    %vm1174 = vcmp.lt.s32.totalorder %v1155, 1
    %vm1175 = vcmp.lt.s32.totalorder %v1155, 2
    %vm1176 = vcmp.lt.s32.totalorder %v1155, 3
    %vm1177 = vcmp.lt.s32.totalorder %v1155, 4
    %v1178 = vsel %vm1174, %v1158, %v1161
    %v1179 = vsel %vm1177, %v1167, 2102212464
    %v1180 = vsel %vm1176, %v1164, %v1179
    %v1181 = vsel %vm1175, %v1178, %v1180
    %v1182 = vsel %vm1174, %v1161, %v1164
    %v1183 = vsel %vm1177, %v1170, 920167782
    %v1184 = vsel %vm1176, %v1167, %v1183
    %v1185 = vsel %vm1175, %v1182, %v1184
    %v1186 = vsel %vm1174, %v1164, %v1167
    %v1187 = vsel %vm1177, %v1173, 1326507024
    %v1188 = vsel %vm1176, %v1170, %v1187
    %v1189 = vsel %vm1175, %v1186, %v1188
    %v1190 = vshll.u32 %v1150, 8
    %v1191 = vand.u32 %v1190, 65535
    %v1192 = vshrl.u32 %v1190, 16
    %v1193 = vand.u32 %v1189, 65535
    %v1194 = vshrl.u32 %v1189, 16
    %v1195 = vmul.u32 %v1191, %v1193
    %v1196 = vmul.u32 %v1191, %v1194
    %v1197 = vmul.u32 %v1192, %v1193
    %v1198 = vmul.u32 %v1192, %v1194
    %v1199 = vshll.u32 %v1196, 16
    %v1200 = vshrl.u32 %v1196, 16
    %v1201 = vshll.u32 %v1197, 16
    %v1202 = vshrl.u32 %v1197, 16
    %vm1203 = vc.u32 %v1195, %v1199
    %v1204 = vsel %vm1203, 1, 0
    %v1205 = vadd.s32 %v1195, %v1199
    %v1206 = vadd.s32 %v1198, %v1204
    %vm1207 = vc.u32 %v1205, %v1201
    %v1208 = vsel %vm1207, 1, 0
    %v1209 = vadd.s32 %v1205, %v1201
    %v1210 = vadd.s32 %v1206, %v1208
    %v1211 = vadd.s32 %v1210, %v1200
    %v1212 = vadd.s32 %v1211, %v1202
    %v1213 = vand.u32 %v1190, 65535
    %v1214 = vshrl.u32 %v1190, 16
    %v1215 = vand.u32 %v1185, 65535
    %v1216 = vshrl.u32 %v1185, 16
    %v1217 = vmul.u32 %v1213, %v1215
    %v1218 = vmul.u32 %v1213, %v1216
    %v1219 = vmul.u32 %v1214, %v1215
    %v1220 = vmul.u32 %v1214, %v1216
    %v1221 = vshll.u32 %v1218, 16
    %v1222 = vshrl.u32 %v1218, 16
    %v1223 = vshll.u32 %v1219, 16
    %v1224 = vshrl.u32 %v1219, 16
    %vm1225 = vc.u32 %v1217, %v1221
    %v1226 = vsel %vm1225, 1, 0
    %v1227 = vadd.s32 %v1217, %v1221
    %v1228 = vadd.s32 %v1220, %v1226
    %vm1229 = vc.u32 %v1227, %v1223
    %v1230 = vsel %vm1229, 1, 0
    %v1231 = vadd.s32 %v1227, %v1223
    %v1232 = vadd.s32 %v1228, %v1230
    %v1233 = vadd.s32 %v1232, %v1222
    %v1234 = vadd.s32 %v1233, %v1224
    %v1235 = vmul.u32 %v1190, %v1181
    %v1236 = vadd.s32 %v1212, %v1231
    %vm1237 = vc.u32 %v1212, %v1231
    %v1238 = vadd.s32 %v1234, 1
    %v1239 = vsel %vm1237, %v1238, %v1234
    %v1240 = vadd.s32 %v1235, %v1239
    %v1241 = vadd.s32 %v1240, 536870912
    %v1242 = vshrl.u32 %v1241, 30
    %v1243 = vshll.u32 %v1242, 30
    %v1244 = vsub.s32 %v1240, %v1243
    %vm1245 = vcmp.lt.s32.totalorder %v1244, 0
    %v1246 = vsub.s32 0, %v1244
    %v1247 = vsel %vm1245, %v1246, %v1244
    %v1248 = vclz %v1247
    %v1249 = vsub.s32 %v1248, 2
    %vm1250 = vcmp.gt.s32.totalorder 0, %v1249
    %v1251 = vsel %vm1250, 0, %v1249
    %v1252 = vsub.s32 32, %v1251
    %v1253 = vshll.u32 %v1244, %v1251
    %v1254 = vshrl.u32 %v1236, %v1252
    %v1255 = vor.u32 %v1253, %v1254
    %v1256 = vsub.s32 4294967266, %v1251
    %v1257 = vadd.s32 %v1256, 127
    %v1258 = vshll.u32 %v1257, 23
    %v1259 = vor.u32 4788187, %v1258
    %v1260 = vand.u32 2147483647, %v1259
    %v1262 = vcvt.s32.f32 %v1255
    %v1263 = vmul.f32 %v1262, %v1260
    %v1264 = vxor.u32 %v1263, 2147483648
    %v1265 = vsel %vm1144, %v1264, %v1263
    %v1266 = vsub.s32 4, %v1242
    %v1267 = vsel %vm1144, %v1266, %v1242
    %v1268 = vsel %vm1143, %v210, %v1265
    %v1269 = vsel %vm1143, 0, %v1267
    %v1270 = vmul.f32 %v1268, %v1268
    %v1271 = vmul.f32 %v1270, -0.001358992
    %v1272 = vadd.f32 %v1271, 0.041655596
    %v1273 = vmul.f32 %v1270, %v1272
    %v1274 = vadd.f32 %v1273, -0.4999988
    %v1275 = vmul.f32 %v1270, %v1274
    %v1276 = vadd.f32 1.0, %v1275
    %v1277 = vmul.f32 %v1268, %v1268
    %v1278 = vmul.f32 %v1277, -0.00019511016
    %v1279 = vadd.f32 %v1278, 0.008332121
    %v1280 = vmul.f32 %v1277, %v1279
    %v1281 = vadd.f32 %v1280, -0.16666654
    %v1282 = vmul.f32 %v1277, %v1281
    %v1283 = vadd.f32 %v1282, 1.0
    %v1284 = vmul.f32 %v1283, %v1268
    %vm1285 = vweird.f32 %v210
    %v1286 = vadd.s32 %v1269, 3
    %v1287 = vand.u32 %v1286, 3
    %vm1288 = vcmp.lt.s32.totalorder %v1287, 2
    %vm1289 = vcmp.eq.s32.totalorder %v1287, 0
    %v1290 = vxor.u32 %v1284, 2147483648
    %v1291 = vsel %vm1289, %v1276, %v1290
    %vm1292 = vcmp.eq.s32.totalorder %v1287, 2
    %v1293 = vxor.u32 %v1276, 2147483648
    %v1294 = vsel %vm1292, %v1293, %v1284
    %v1295 = vsel %vm1288, %v1291, %v1294
    %v1296 = vsel %vm1285, nan, %v1295
    %v1297 = vand.u32 2147483647, %v211
    %vm1298 = vcmp.le.f32.partialorder %v1297, 0.7853982
    %vm1299 = vcmp.lt.s32.totalorder %v211, 0
    %v1300 = vand.u32 %v211, 2139095040
    %v1301 = vshrl.u32 %v1300, 23
    %v1302 = vsub.s32 %v1301, 127
    %v1303 = vand.u32 2147483647, %v211
    %v1304 = vand.u32 %v1303, 8388607
    %v1305 = vor.u32 %v1304, 8388608
    %v1306 = vsub.s32 0, %v1305
    %v1307 = vadd.s32 %v1302, 1
    %vm1308 = vcmp.gt.s32.totalorder %v1307, 0
    %v1309 = vsel %vm1308, %v1307, 0
    %v1310 = vshrl.u32 %v1309, 5
    %v1311 = vand.u32 %v1309, 31
    %v1312 = vsub.s32 32, %v1311
    %v1313 = vshrl.u32 683565275, %v1312
    %v1314 = vshll.u32 683565275, %v1311
    %v1315 = vshrl.u32 2475754826, %v1312
    %v1316 = vor.u32 %v1314, %v1315
    %v1317 = vshll.u32 2475754826, %v1311
    %v1318 = vshrl.u32 2131351028, %v1312
    %v1319 = vor.u32 %v1317, %v1318
    %v1320 = vshll.u32 2131351028, %v1311
    %v1321 = vshrl.u32 2102212464, %v1312
    %v1322 = vor.u32 %v1320, %v1321
    %v1323 = vshll.u32 2102212464, %v1311
    %v1324 = vshrl.u32 920167782, %v1312
    %v1325 = vor.u32 %v1323, %v1324
    %v1326 = vshll.u32 920167782, %v1311
    %v1327 = vshrl.u32 1326507024, %v1312
    %v1328 = vor.u32 %v1326, %v1327
    %vm1329 = vcmp.lt.s32.totalorder %v1310, 1
    %vm1330 = vcmp.lt.s32.totalorder %v1310, 2
    %vm1331 = vcmp.lt.s32.totalorder %v1310, 3
    %vm1332 = vcmp.lt.s32.totalorder %v1310, 4
    %v1333 = vsel %vm1329, %v1313, %v1316
    %v1334 = vsel %vm1332, %v1322, 2102212464
    %v1335 = vsel %vm1331, %v1319, %v1334
    %v1336 = vsel %vm1330, %v1333, %v1335
    %v1337 = vsel %vm1329, %v1316, %v1319
    %v1338 = vsel %vm1332, %v1325, 920167782
    %v1339 = vsel %vm1331, %v1322, %v1338
    %v1340 = vsel %vm1330, %v1337, %v1339
    %v1341 = vsel %vm1329, %v1319, %v1322
    %v1342 = vsel %vm1332, %v1328, 1326507024
    %v1343 = vsel %vm1331, %v1325, %v1342
    %v1344 = vsel %vm1330, %v1341, %v1343
    %v1345 = vshll.u32 %v1305, 8
    %v1346 = vand.u32 %v1345, 65535
    %v1347 = vshrl.u32 %v1345, 16
    %v1348 = vand.u32 %v1344, 65535
    %v1349 = vshrl.u32 %v1344, 16
    %v1350 = vmul.u32 %v1346, %v1348
    %v1351 = vmul.u32 %v1346, %v1349
    %v1352 = vmul.u32 %v1347, %v1348
    %v1353 = vmul.u32 %v1347, %v1349
    %v1354 = vshll.u32 %v1351, 16
    %v1355 = vshrl.u32 %v1351, 16
    %v1356 = vshll.u32 %v1352, 16
    %v1357 = vshrl.u32 %v1352, 16
    %vm1358 = vc.u32 %v1350, %v1354
    %v1359 = vsel %vm1358, 1, 0
    %v1360 = vadd.s32 %v1350, %v1354
    %v1361 = vadd.s32 %v1353, %v1359
    %vm1362 = vc.u32 %v1360, %v1356
    %v1363 = vsel %vm1362, 1, 0
    %v1364 = vadd.s32 %v1360, %v1356
    %v1365 = vadd.s32 %v1361, %v1363
    %v1366 = vadd.s32 %v1365, %v1355
    %v1367 = vadd.s32 %v1366, %v1357
    %v1368 = vand.u32 %v1345, 65535
    %v1369 = vshrl.u32 %v1345, 16
    %v1370 = vand.u32 %v1340, 65535
    %v1371 = vshrl.u32 %v1340, 16
    %v1372 = vmul.u32 %v1368, %v1370
    %v1373 = vmul.u32 %v1368, %v1371
    %v1374 = vmul.u32 %v1369, %v1370
    %v1375 = vmul.u32 %v1369, %v1371
    %v1376 = vshll.u32 %v1373, 16
    %v1377 = vshrl.u32 %v1373, 16
    %v1378 = vshll.u32 %v1374, 16
    %v1379 = vshrl.u32 %v1374, 16
    %vm1380 = vc.u32 %v1372, %v1376
    %v1381 = vsel %vm1380, 1, 0
    %v1382 = vadd.s32 %v1372, %v1376
    %v1383 = vadd.s32 %v1375, %v1381
    %vm1384 = vc.u32 %v1382, %v1378
    %v1385 = vsel %vm1384, 1, 0
    %v1386 = vadd.s32 %v1382, %v1378
    %v1387 = vadd.s32 %v1383, %v1385
    %v1388 = vadd.s32 %v1387, %v1377
    %v1389 = vadd.s32 %v1388, %v1379
    %v1390 = vmul.u32 %v1345, %v1336
    %v1391 = vadd.s32 %v1367, %v1386
    %vm1392 = vc.u32 %v1367, %v1386
    %v1393 = vadd.s32 %v1389, 1
    %v1394 = vsel %vm1392, %v1393, %v1389
    %v1395 = vadd.s32 %v1390, %v1394
    %v1396 = vadd.s32 %v1395, 536870912
    %v1397 = vshrl.u32 %v1396, 30
    %v1398 = vshll.u32 %v1397, 30
    %v1399 = vsub.s32 %v1395, %v1398
    %vm1400 = vcmp.lt.s32.totalorder %v1399, 0
    %v1401 = vsub.s32 0, %v1399
    %v1402 = vsel %vm1400, %v1401, %v1399
    %v1403 = vclz %v1402
    %v1404 = vsub.s32 %v1403, 2
    %vm1405 = vcmp.gt.s32.totalorder 0, %v1404
    %v1406 = vsel %vm1405, 0, %v1404
    %v1407 = vsub.s32 32, %v1406
    %v1408 = vshll.u32 %v1399, %v1406
    %v1409 = vshrl.u32 %v1391, %v1407
    %v1410 = vor.u32 %v1408, %v1409
    %v1411 = vsub.s32 4294967266, %v1406
    %v1412 = vadd.s32 %v1411, 127
    %v1413 = vshll.u32 %v1412, 23
    %v1414 = vor.u32 4788187, %v1413
    %v1415 = vand.u32 2147483647, %v1414
    %v1417 = vcvt.s32.f32 %v1410
    %v1418 = vmul.f32 %v1417, %v1415
    %v1419 = vxor.u32 %v1418, 2147483648
    %v1420 = vsel %vm1299, %v1419, %v1418
    %v1421 = vsub.s32 4, %v1397
    %v1422 = vsel %vm1299, %v1421, %v1397
    %v1423 = vsel %vm1298, %v211, %v1420
    %v1424 = vsel %vm1298, 0, %v1422
    %v1425 = vmul.f32 %v1423, %v1423
    %v1426 = vmul.f32 %v1425, -0.001358992
    %v1427 = vadd.f32 %v1426, 0.041655596
    %v1428 = vmul.f32 %v1425, %v1427
    %v1429 = vadd.f32 %v1428, -0.4999988
    %v1430 = vmul.f32 %v1425, %v1429
    %v1431 = vadd.f32 1.0, %v1430
    %v1432 = vmul.f32 %v1423, %v1423
    %v1433 = vmul.f32 %v1432, -0.00019511016
    %v1434 = vadd.f32 %v1433, 0.008332121
    %v1435 = vmul.f32 %v1432, %v1434
    %v1436 = vadd.f32 %v1435, -0.16666654
    %v1437 = vmul.f32 %v1432, %v1436
    %v1438 = vadd.f32 %v1437, 1.0
    %v1439 = vmul.f32 %v1438, %v1423
    %vm1440 = vweird.f32 %v211
    %v1441 = vadd.s32 %v1424, 3
    %v1442 = vand.u32 %v1441, 3
    %vm1443 = vcmp.lt.s32.totalorder %v1442, 2
    %vm1444 = vcmp.eq.s32.totalorder %v1442, 0
    %v1445 = vxor.u32 %v1439, 2147483648
    %v1446 = vsel %vm1444, %v1431, %v1445
    %vm1447 = vcmp.eq.s32.totalorder %v1442, 2
    %v1448 = vxor.u32 %v1431, 2147483648
    %v1449 = vsel %vm1447, %v1448, %v1439
    %v1450 = vsel %vm1443, %v1446, %v1449
    %v1451 = vsel %vm1440, nan, %v1450
    %v1452 = vmul.f32 %v171, %v986
    %v1453 = vmul.f32 %v183, %v1141
    %v1454 = vmul.f32 %v195, %v1296
    %v1455 = vmul.f32 %v207, %v1451
    %v1456 = vld [vmem:[#allocation4] sm:$0xff]
    %v1457 = vld [vmem:[#allocation4 + $0x8] sm:$0xff]
    %v1458 = vmul.f32 %v1456, 0.1
    %v1459 = vmul.f32 %v1457, 0.1
    %1462 = vst [vmem:[#allocation1] ss:$4 sm:$0xff] %v1458
    %s1463 = scalar_lea.vmem [#allocation1], 32
    %1464 = vst [vmem:[%s1463] ss:$4 sm:$0xff] %v1459
    %v1465 = vld.sshfl [vmem:[#allocation1] sm:$0xff pattern:$0x73625140]
    %v1466 = vld.sshfl [vmem:[#allocation1 + $0x8] sm:$0xff pattern:$0x73625140]
    %v1467 = vld.sshfl [vmem:[#allocation1 + $0x10] sm:$0xff pattern:$0x73625140]
    %v1468 = vld.sshfl [vmem:[#allocation1 + $0x18] sm:$0xff pattern:$0x73625140]
    %v1469 = vld.sshfl [vmem:[#allocation1 + $0x20] sm:$0xff pattern:$0x73625140]
    %v1470 = vld.sshfl [vmem:[#allocation1 + $0x28] sm:$0xff pattern:$0x73625140]
    %v1471 = vld.sshfl [vmem:[#allocation1 + $0x30] sm:$0xff pattern:$0x73625140]
    %v1472 = vld.sshfl [vmem:[#allocation1 + $0x38] sm:$0xff pattern:$0x73625140]
    %v1481 = vmul.f32 %v828, %v1465
    %v1482 = vmul.f32 %v829, %v1466
    %v1483 = vmul.f32 %v830, %v1467
    %v1484 = vmul.f32 %v831, %v1468
    %v1485 = vmul.f32 %v1452, %v1469
    %v1486 = vmul.f32 %v1453, %v1470
    %v1487 = vmul.f32 %v1454, %v1471
    %v1488 = vmul.f32 %v1455, %v1472
    %v1497 = vrot.slane %v1482, 6
    %v1498 = vrot.slane %v1483, 4
    %v1499 = vrot.slane %v1484, 2
    %v1500 = vrot.slane %v1486, 6
    %v1501 = vrot.slane %v1487, 4
    %v1502 = vrot.slane %v1488, 2
    %vm1503 = vcmask 1041408
    %v1504 = vsel %vm1503, %v1481, %v1497
    %vm1505 = vcmask 1045508
    %v1506 = vsel %vm1505, %v1498, %v1499
    %vm1507 = vcmask 1043456
    %v1508 = vsel %vm1507, %v1504, %v1506
    %v1509 = vsel %vm1503, %v1485, %v1500
    %v1510 = vsel %vm1505, %v1501, %v1502
    %v1511 = vsel %vm1507, %v1509, %v1510
    %v1514 = vadd.f32 %v1456, %v1508
    %v1515 = vadd.f32 %v1457, %v1511
    %1516 = vst [vmem:[#allocation7] sm:$0xff] %v1514
    %1517 = vst [vmem:[#allocation7 + $0x8] sm:$0xff] %v1515
    // Predicated region
    $region10: #{tpu_custom_call.1} parent=1 // pred_check
      _
    $region11: #{tpu_custom_call.1} parent=1 // pred_check_branch
      %1519 = sbr.rel (0) target = $region13
    $region12: #{tpu_custom_call.1} parent=1 // pred_region
      %1521 = vsyncadd [#allocation6], 0
      %s1523 = sshll.u32 [#allocation7], 4
      %s1524 = int_to_ptr.vmem [resolvable:$true] %s1523
      %s1525 = sshll.u32 %s2, 4
      %s1526 = int_to_ptr.hbm [resolvable:$true] %s1525
      %1528 = dma.vmem_to_hbm [thread:$0]  %s1524, 256, %s1526, [#allocation6]
    $region13: #{tpu_custom_call.1} parent=1 // pred_fallthru
      _
    // Predicated region
    $region14: #{tpu_custom_call.1} parent=1 // pred_check
      _
    $region15: #{tpu_custom_call.1} parent=1 // pred_check_branch
      %1530 = sbr.rel (0) target = $region17
    $region16: #{tpu_custom_call.1} parent=1 // pred_region
      %1532 = dma.done [#allocation6], 256
    $region17: #{tpu_custom_call.1} parent=1 // pred_fallthru
      _
    %1533 = vsyncpa [#allocation5], 1
    %1534 = vsyncpa [#allocation6], 1

</llo_original>
